<compile_context>
chip_gen: v7x
topology: tpu7x:2x2x1
jax: 0.10.0
libtpu: 0.0.40
codegen_flags: <defaults>
</compile_context>

<pallas_src>
import jax
import jax.numpy as jnp
from jax.experimental import pallas as pl
from jax.experimental.pallas import tpu as pltpu


def hra_ffn_kernel(w1_ref, w2_ref, x_ref, o_ref):
    # w1_ref, w2_ref: (Dp, Dp) precomposed (block-diagonal) reflection matrices
    # x_ref:          (tm, Dp) lane-packed token tile
    x = x_ref[...]
    h = jnp.dot(x, w1_ref[...], preferred_element_type=jnp.float32)   # HRA #1
    h = jnp.abs(h)                                                    # ABS
    # Dropout (eval) -> identity
    o = jnp.dot(h.astype(w2_ref.dtype), w2_ref[...],
                preferred_element_type=jnp.float32)                   # HRA #2
    # Dropout (eval) -> identity
    o_ref[...] = o.astype(o_ref.dtype)


def _compose_reflections(u_all, dim):
    """Normalize the 4 reflection vectors and compose them into W1, W2 (f32).

    W1 = H0 @ H1, W2 = H2 @ H3 with H_k = I - 2 * u_hat_k u_hat_k^T, so that
    (x @ H0) @ H1 == x @ W1 (row-vector convention, matching the PyTorch code).
    """
    u = u_all.astype(jnp.float32)
    u = u / jnp.linalg.norm(u, axis=1, keepdims=True)
    eye = jnp.eye(dim, dtype=jnp.float32)
    H = eye[None, :, :] - 2.0 * u[:, :, None] * u[:, None, :]          # (4, D, D)
    hp = jax.lax.Precision.HIGHEST
    W1 = jnp.dot(H[0], H[1], precision=hp)
    W2 = jnp.dot(H[2], H[3], precision=hp)
    return W1, W2


def hra_ffn(x, u_all):
    """x: (B, N, D) tokens; u_all: (4, D) un-normalized reflection vectors
    [hra1_u0, hra1_u1, hra2_u0, hra2_u1]."""
    B, N, D = x.shape
    M = B * N

    # bf16 inputs stay bf16 on the MXU (f32 accumulate); everything else in f32.
    compute_dtype = jnp.bfloat16 if x.dtype == jnp.bfloat16 else jnp.float32

    W1, W2 = _compose_reflections(u_all, D)

    # Lane packing: put `pack` tokens of width D side-by-side in one 128-lane row.
    pack = 128 // D if (D < 128 and 128 % D == 0) else 1
    Dp = pack * D
    if pack > 1:
        eye_p = jnp.eye(pack, dtype=jnp.float32)
        W1 = jnp.kron(eye_p, W1)          # block_diag(W1, ..., W1)  -> (Dp, Dp)
        W2 = jnp.kron(eye_p, W2)
    W1 = W1.astype(compute_dtype)
    W2 = W2.astype(compute_dtype)

    # Packed-row tiling.  Target 1024 rows/tile (512 KiB f32); shrink for tiny M.
    R = pl.cdiv(M, pack)                  # packed rows needed
    tm = 1024
    if R < tm:
        tm = max(8, int(pl.next_power_of_2(R)))
    Rp = pl.cdiv(R, tm) * tm              # padded packed rows (grid-divisible)
    Mp = Rp * pack

    x2 = x.reshape(M, D)
    if Mp != M:
        x2 = jnp.pad(x2, ((0, Mp - M), (0, 0)))
    xp = x2.reshape(Rp, Dp)               # row-major view: `pack` tokens per row

    grid = (Rp // tm,)
    out = pl.pallas_call(
        hra_ffn_kernel,
        out_shape=jax.ShapeDtypeStruct((Rp, Dp), x.dtype),
        grid_spec=pltpu.PrefetchScalarGridSpec(
            num_scalar_prefetch=0,
            grid=grid,
            in_specs=[
                pl.BlockSpec((Dp, Dp), lambda i: (0, 0)),   # W1 (resident)
                pl.BlockSpec((Dp, Dp), lambda i: (0, 0)),   # W2 (resident)
                pl.BlockSpec((tm, Dp), lambda i: (i, 0)),   # packed token tile
            ],
            out_specs=pl.BlockSpec((tm, Dp), lambda i: (i, 0)),
        ),
        compiler_params=pltpu.CompilerParams(
            dimension_semantics=("parallel",),              # shard tiles over TCs
            vmem_limit_bytes=64 * 1024 * 1024,
        ),
    )(W1, W2, xp)

    return out.reshape(Mp, D)[:M].reshape(B, N, D)


def init_hra_u(key, dim):
    """Mimics kaiming_uniform_(a=sqrt(5)) on a (dim, 1) tensor then repeat_interleave(2, dim=1).

    For a (dim, 1) weight, fan_in = 1, gain = sqrt(2/(1+5)) = sqrt(1/3),
    bound = sqrt(3) * gain / sqrt(fan_in) = 1.0  ->  U(-1, 1).
    repeat_interleave makes both reflection vectors of one HRA identical.
    """
    half_u = jax.random.uniform(key, (dim,), minval=-1.0, maxval=1.0, dtype=jnp.float32)
    return jnp.stack([half_u, half_u], axis=0)  # (2, dim)


def hra_ffn_reference(x, u_all):
    """Pure-JAX reference that follows the PyTorch op sequence exactly."""
    B, N, D = x.shape
    h = x.reshape(B * N, D).astype(jnp.float32)

    def reflect(h, u):
        u = u.astype(jnp.float32)
        u = u / jnp.linalg.norm(u)
        return h - 2.0 * (h @ u[:, None]) @ u[None, :]

    h = reflect(h, u_all[0])
    h = reflect(h, u_all[1])
    h = jnp.abs(h)
    h = reflect(h, u_all[2])
    h = reflect(h, u_all[3])
    return h.reshape(B, N, D).astype(x.dtype)


if __name__ == "__main__":
    # args = {'dim': 32, 'mlp_dim': 64, 'dropout': 0.0}
    dim = 32
    batch, seq = 2, 8

    key = jax.random.PRNGKey(0)
    kx, k1, k2, k3 = jax.random.split(key, 4)

    x = jax.random.normal(kx, (batch, seq, dim), dtype=jnp.float32)

    # Case 1: faithful PyTorch init (repeat_interleave -> u0 == u1 per HRA,
    # so each HRA is H*H = I at init and the FFN reduces to abs(x)).
    u_hra1 = init_hra_u(k1, dim)                           # (2, dim)
    u_hra2 = init_hra_u(k2, dim)                           # (2, dim)
    u_init = jnp.concatenate([u_hra1, u_hra2], axis=0)     # (4, dim)

    out1 = jax.block_until_ready(hra_ffn(x, u_init))
    ref1 = hra_ffn_reference(x, u_init)
    assert out1.shape == (batch, seq, dim)
    assert jnp.allclose(out1, ref1, atol=1e-3, rtol=1e-3), "mismatch vs reference (init u)"

    # Case 2: four independent vectors (post-training-like) so the reflection
    # math is actually exercised, not just abs(x).
    u_trained = jax.random.normal(k3, (4, dim), dtype=jnp.float32)
    out2 = jax.block_until_ready(hra_ffn(x, u_trained))
    ref2 = hra_ffn_reference(x, u_trained)
    assert jnp.allclose(out2, ref2, atol=1e-3, rtol=1e-3), "mismatch vs reference (general u)"

    print("KERNEL_OK")
</pallas_src>

<mosaic_0001>
module attributes {stable_mosaic.version = 11 : i64} {
  func.func @hra_ffn_kernel(%arg0: i32, %arg1: memref<128x128xf32, #tpu.memory_space<vmem>>, %arg2: memref<128x128xf32, #tpu.memory_space<vmem>>, %arg3: memref<8x128xf32, #tpu.memory_space<vmem>>, %arg4: memref<8x128xf32, #tpu.memory_space<vmem>>) attributes {dimension_semantics = [#tpu.dimension_semantics<parallel>], iteration_bounds = array<i64: 1>, scalar_prefetch = 0 : i64, scratch_operands = 0 : i64, tpu.core_type = #tpu.core_type<tc>, window_params = [{pipeline_mode = #tpu.pipeline_mode<synchronous>, transform_indices = @transform_0, window_bounds = array<i64: 128, 128>}, {pipeline_mode = #tpu.pipeline_mode<synchronous>, transform_indices = @transform_1, window_bounds = array<i64: 128, 128>}, {transform_indices = @transform_2, window_bounds = array<i64: 8, 128>}, {transform_indices = @transform_3, window_bounds = array<i64: 8, 128>}]} {
    %c0 = arith.constant 0 : index
    %c0_0 = arith.constant 0 : index
    %0 = vector.load %arg3[%c0, %c0_0] : memref<8x128xf32, #tpu.memory_space<vmem>>, vector<8x128xf32>
    %c0_1 = arith.constant 0 : index
    %c0_2 = arith.constant 0 : index
    %1 = vector.load %arg1[%c0_1, %c0_2] : memref<128x128xf32, #tpu.memory_space<vmem>>, vector<128x128xf32>
    %cst = arith.constant dense<0.000000e+00> : vector<8x128xf32>
    %2 = tpu.matmul %0, %1, %cst {dimension_numbers = #tpu.dot_dimension_numbers<[1], [0], [0], [1], [0, 0, 1, 1], [], []>} : vector<8x128xf32>, vector<128x128xf32>, vector<8x128xf32> -> vector<8x128xf32>
    %3 = math.absf %2 : vector<8x128xf32>
    %c0_3 = arith.constant 0 : index
    %c0_4 = arith.constant 0 : index
    %4 = vector.load %arg2[%c0_3, %c0_4] : memref<128x128xf32, #tpu.memory_space<vmem>>, vector<128x128xf32>
    %cst_5 = arith.constant dense<0.000000e+00> : vector<8x128xf32>
    %5 = tpu.matmul %3, %4, %cst_5 {dimension_numbers = #tpu.dot_dimension_numbers<[1], [0], [0], [1], [0, 0, 1, 1], [], []>} : vector<8x128xf32>, vector<128x128xf32>, vector<8x128xf32> -> vector<8x128xf32>
    %c0_6 = arith.constant 0 : index
    %c0_7 = arith.constant 0 : index
    %6 = vector.load %arg4[%c0_6, %c0_7] : memref<8x128xf32, #tpu.memory_space<vmem>>, vector<8x128xf32>
    tpu.vector_store %arg4[%c0_6, %c0_7], %5 {strides = array<i32>} : memref<8x128xf32, #tpu.memory_space<vmem>>, vector<8x128xf32>,
    return
  }
  func.func @transform_0(%arg0: i32) -> (i32, i32) {
    %c0_i32 = arith.constant 0 : i32
    %c0_i32_0 = arith.constant 0 : i32
    %c0_i32_1 = arith.constant 0 : i32
    return %c0_i32, %c0_i32_0 : i32, i32
  }
  func.func @transform_1(%arg0: i32) -> (i32, i32) {
    %c0_i32 = arith.constant 0 : i32
    %c0_i32_0 = arith.constant 0 : i32
    %c0_i32_1 = arith.constant 0 : i32
    return %c0_i32, %c0_i32_0 : i32, i32
  }
  func.func @transform_2(%arg0: i32) -> (i32, i32) {
    %c0_i32 = arith.constant 0 : i32
    %c0_i32_0 = arith.constant 0 : i32
    return %arg0, %c0_i32 : i32, i32
  }
  func.func @transform_3(%arg0: i32) -> (i32, i32) {
    %c0_i32 = arith.constant 0 : i32
    %c0_i32_0 = arith.constant 0 : i32
    return %arg0, %c0_i32 : i32, i32
  }
}

</mosaic_0001>

<llo_original>
// kernel: tpu_custom_call.1
$region0: #{tpu_custom_call.1}
  #allocation0 [shape = 'u32[]', space=smem, size = 0x4, offset = 0x4, fixed_abs, tag = 'smem constant byte address 0x4 - core index']
  #allocation1 [shape = 'u32[144,128]{1,0:T(1,128)}', space=vmem, size = 0x12000, scoped, tag = 'internal scratch']
  %s0 = inlined_call_operand.hbm [shape: f32[128,128], index: 0, kind: input, shape index: {}]
  %s1 = inlined_call_operand.hbm [shape: f32[128,128], index: 1, kind: input, shape index: {}]
  %s2 = inlined_call_operand.hbm [shape: f32[8,128], index: 2, kind: input, shape index: {}]
  %s3 = inlined_call_operand.hbm [shape: f32[8,128], index: 3, kind: output, shape index: {}]
  %s4 = sld [smem:[#allocation0]]
  $region34: #{tpu_custom_call.1} parent=0
    _
  %s6 = ssub.s32 1, %s4
  %s7 = scalar_select 0, %s6, %s4
  $region1: #{tpu_custom_call.1} parent=0
    #allocation2 [shape = 'u8[65536]{0}', space=vmem, size = 0x10000, scoped, tag = 'input window, operand 0, single buffered']
    #allocation3 [shape = 's32[1]{0}', space=sflag, size = 0x4, scoped, tag = 'scoped memory for tpu_custom_call.1']
    #allocation4 [shape = 's32[1]{0}', space=sflag, size = 0x4, scoped, tag = 'scoped memory for tpu_custom_call.1']
    #allocation5 [shape = 'u8[65536]{0}', space=vmem, size = 0x10000, scoped, tag = 'input window, operand 1, single buffered']
    #allocation6 [shape = 's32[1]{0}', space=sflag, size = 0x4, scoped, tag = 'scoped memory for tpu_custom_call.1']
    #allocation7 [shape = 'u8[4096]{0}', space=vmem, size = 0x1000, scoped, tag = 'input window, operand 2, single buffered']
    #allocation8 [shape = 'u8[4096]{0}', space=vmem, size = 0x1000, scoped, tag = 'output window, operand 0, single buffered']
    %8 = vsyncpa [#allocation3], 0
    %9 = vsyncpa [#allocation6], 0
    %10 = vsyncpa [#allocation4], 0
    // Predicated region
    $region2: #{tpu_custom_call.1} parent=1 // pred_check
      _
    $region3: #{tpu_custom_call.1} parent=1 // pred_check_branch
      %12 = sbr.rel (0) target = $region5
    $region4: #{tpu_custom_call.1} parent=1 // pred_region
      %s14 = ssub.s32 2048, 2048
      %15 = vsyncadd [#allocation3], %s14
      %s16 = sshll.u32 [#allocation2], 4
      %s17 = int_to_ptr.vmem [resolvable:$true] %s16
      %22 = dma.hbm_to_vmem [thread:$0]  %s0, 2048, %s17, [#allocation3], 128, 128, 8
    $region5: #{tpu_custom_call.1} parent=1 // pred_fallthru
      _
    // Predicated region
    $region6: #{tpu_custom_call.1} parent=1 // pred_check
      _
    $region7: #{tpu_custom_call.1} parent=1 // pred_check_branch
      %24 = sbr.rel (0) target = $region9
    $region8: #{tpu_custom_call.1} parent=1 // pred_region
      %s26 = ssub.s32 2048, 2048
      %27 = vsyncadd [#allocation6], %s26
      %s28 = sshll.u32 [#allocation5], 4
      %s29 = int_to_ptr.vmem [resolvable:$true] %s28
      %34 = dma.hbm_to_vmem [thread:$0]  %s1, 2048, %s29, [#allocation6], 128, 128, 8
    $region9: #{tpu_custom_call.1} parent=1 // pred_fallthru
      _
    // Predicated region
    $region10: #{tpu_custom_call.1} parent=1 // pred_check
      _
    $region11: #{tpu_custom_call.1} parent=1 // pred_check_branch
      %36 = sbr.rel (0) target = $region13
    $region12: #{tpu_custom_call.1} parent=1 // pred_region
      %s38 = ssub.s32 128, 128
      %39 = vsyncadd [#allocation6], %s38
      %s41 = sshll.u32 [#allocation7], 4
      %s42 = int_to_ptr.vmem [resolvable:$true] %s41
      %44 = dma.hbm_to_vmem [thread:$0]  %s2, 128, %s42, [#allocation6]
    $region13: #{tpu_custom_call.1} parent=1 // pred_fallthru
      _
    // Predicated region
    $region14: #{tpu_custom_call.1} parent=1 // pred_check
      _
    $region15: #{tpu_custom_call.1} parent=1 // pred_check_branch
      %46 = sbr.rel (0) target = $region17
    $region16: #{tpu_custom_call.1} parent=1 // pred_region
      %47 = dma.done [#allocation3], 2048
    $region17: #{tpu_custom_call.1} parent=1 // pred_fallthru
      _
    // Predicated region
    $region18: #{tpu_custom_call.1} parent=1 // pred_check
      _
    $region19: #{tpu_custom_call.1} parent=1 // pred_check_branch
      %49 = sbr.rel (0) target = $region21
    $region20: #{tpu_custom_call.1} parent=1 // pred_region
      %50 = dma.done [#allocation6], 2048
    $region21: #{tpu_custom_call.1} parent=1 // pred_fallthru
      _
    // Predicated region
    $region22: #{tpu_custom_call.1} parent=1 // pred_check
      _
    $region23: #{tpu_custom_call.1} parent=1 // pred_check_branch
      %52 = sbr.rel (0) target = $region25
    $region24: #{tpu_custom_call.1} parent=1 // pred_region
      %53 = dma.done [#allocation6], 128
    $region25: #{tpu_custom_call.1} parent=1 // pred_fallthru
      _
    %v54 = vld [vmem:[#allocation7] sm:$0xff]
    %v55 = vld [vmem:[#allocation2] sm:$0xff]
    %v56 = vld [vmem:[#allocation2 + $0x8] sm:$0xff]
    %v57 = vld [vmem:[#allocation2 + $0x10] sm:$0xff]
    %v58 = vld [vmem:[#allocation2 + $0x18] sm:$0xff]
    %v59 = vld [vmem:[#allocation2 + $0x20] sm:$0xff]
    %v60 = vld [vmem:[#allocation2 + $0x28] sm:$0xff]
    %v61 = vld [vmem:[#allocation2 + $0x30] sm:$0xff]
    %v62 = vld [vmem:[#allocation2 + $0x38] sm:$0xff]
    %v63 = vld [vmem:[#allocation2 + $0x40] sm:$0xff]
    %v64 = vld [vmem:[#allocation2 + $0x48] sm:$0xff]
    %v65 = vld [vmem:[#allocation2 + $0x50] sm:$0xff]
    %v66 = vld [vmem:[#allocation2 + $0x58] sm:$0xff]
    %v67 = vld [vmem:[#allocation2 + $0x60] sm:$0xff]
    %v68 = vld [vmem:[#allocation2 + $0x68] sm:$0xff]
    %v69 = vld [vmem:[#allocation2 + $0x70] sm:$0xff]
    %v70 = vld [vmem:[#allocation2 + $0x78] sm:$0xff]
    %71 = vmatprep.subr.mxu0 0.0
    %72 = vmatpush1.msra.mxu0 %v55
    %73 = vmatprep.subr.mxu0 0.0
    %74 = vmatpush1.msra.mxu0 %v56
    %75 = vmatprep.subr.mxu0 0.0
    %76 = vmatpush1.msra.mxu0 %v57
    %77 = vmatprep.subr.mxu0 0.0
    %78 = vmatpush1.msra.mxu0 %v58
    %79 = vmatprep.subr.mxu0 0.0
    %80 = vmatpush1.msra.mxu0 %v59
    %81 = vmatprep.subr.mxu0 0.0
    %82 = vmatpush1.msra.mxu0 %v60
    %83 = vmatprep.subr.mxu0 0.0
    %84 = vmatpush1.msra.mxu0 %v61
    %85 = vmatprep.subr.mxu0 0.0
    %86 = vmatpush1.msra.mxu0 %v62
    %87 = vmatprep.subr.mxu0 0.0
    %88 = vmatpush1.msra.mxu0 %v63
    %89 = vmatprep.subr.mxu0 0.0
    %90 = vmatpush1.msra.mxu0 %v64
    %91 = vmatprep.subr.mxu0 0.0
    %92 = vmatpush1.msra.mxu0 %v65
    %93 = vmatprep.subr.mxu0 0.0
    %94 = vmatpush1.msra.mxu0 %v66
    %95 = vmatprep.subr.mxu0 0.0
    %96 = vmatpush1.msra.mxu0 %v67
    %97 = vmatprep.subr.mxu0 0.0
    %98 = vmatpush1.msra.mxu0 %v68
    %99 = vmatprep.subr.mxu0 0.0
    %100 = vmatpush1.msra.mxu0 %v69
    %101 = vmatprep.subr.mxu0 0.0
    %102 = vmatpush1.msra.mxu0 %v70
    %103 = vmatprep.subr.mxu0 0.0
    %104 = vmatpush1.msra.mxu0 0.0
    %105 = vmatprep.subr.mxu0 0.0
    %106 = vmatpush1.msra.mxu0 0.0
    %107 = vmatprep.subr.mxu0 0.0
    %108 = vmatpush1.msra.mxu0 0.0
    %109 = vmatprep.subr.mxu0 0.0
    %110 = vmatpush1.msra.mxu0 0.0
    %111 = vmatprep.subr.mxu0 0.0
    %112 = vmatpush1.msra.mxu0 0.0
    %113 = vmatprep.subr.mxu0 0.0
    %114 = vmatpush1.msra.mxu0 0.0
    %115 = vmatprep.subr.mxu0 0.0
    %116 = vmatpush1.msra.mxu0 0.0
    %117 = vmatprep.subr.mxu0 0.0
    %118 = vmatpush1.msra.mxu0 0.0
    %119 = vmatprep.subr.mxu0 0.0
    %120 = vmatpush1.msra.mxu0 0.0
    %121 = vmatprep.subr.mxu0 0.0
    %122 = vmatpush1.msra.mxu0 0.0
    %123 = vmatprep.subr.mxu0 0.0
    %124 = vmatpush1.msra.mxu0 0.0
    %125 = vmatprep.subr.mxu0 0.0
    %126 = vmatpush1.msra.mxu0 0.0
    %127 = vmatprep.subr.mxu0 0.0
    %128 = vmatpush1.msra.mxu0 0.0
    %129 = vmatprep.subr.mxu0 0.0
    %130 = vmatpush1.msra.mxu0 0.0
    %131 = vmatprep.subr.mxu0 0.0
    %132 = vmatpush1.msra.mxu0 0.0
    %133 = vmatprep.subr.mxu0 0.0
    %134 = vmatpush1.msra.mxu0 0.0
    %135 = vmatprep.mubr.f32.mxu0 0.0
    %136 = vmatmul.mubr.f32.gmra.mrb[0].mxu0 %v54
    %v137 = vpop.f32.mrb[0].mxu0
    %v138 = vadd.f32 0.0, %v137
    %v139 = vpop.f32.mrb[0].mxu0
    %140 = vdwg.mxu0
    %v141 = vand.u32 2147483647, %v138
    %v142 = vld [vmem:[#allocation5] sm:$0xff]
    %v143 = vld [vmem:[#allocation5 + $0x8] sm:$0xff]
    %v144 = vld [vmem:[#allocation5 + $0x10] sm:$0xff]
    %v145 = vld [vmem:[#allocation5 + $0x18] sm:$0xff]
    %v146 = vld [vmem:[#allocation5 + $0x20] sm:$0xff]
    %v147 = vld [vmem:[#allocation5 + $0x28] sm:$0xff]
    %v148 = vld [vmem:[#allocation5 + $0x30] sm:$0xff]
    %v149 = vld [vmem:[#allocation5 + $0x38] sm:$0xff]
    %v150 = vld [vmem:[#allocation5 + $0x40] sm:$0xff]
    %v151 = vld [vmem:[#allocation5 + $0x48] sm:$0xff]
    %v152 = vld [vmem:[#allocation5 + $0x50] sm:$0xff]
    %v153 = vld [vmem:[#allocation5 + $0x58] sm:$0xff]
    %v154 = vld [vmem:[#allocation5 + $0x60] sm:$0xff]
    %v155 = vld [vmem:[#allocation5 + $0x68] sm:$0xff]
    %v156 = vld [vmem:[#allocation5 + $0x70] sm:$0xff]
    %v157 = vld [vmem:[#allocation5 + $0x78] sm:$0xff]
    %158 = vmatprep.subr.mxu0 0.0
    %159 = vmatpush1.msra.mxu0 %v142
    %160 = vmatprep.subr.mxu0 0.0
    %161 = vmatpush1.msra.mxu0 %v143
    %162 = vmatprep.subr.mxu0 0.0
    %163 = vmatpush1.msra.mxu0 %v144
    %164 = vmatprep.subr.mxu0 0.0
    %165 = vmatpush1.msra.mxu0 %v145
    %166 = vmatprep.subr.mxu0 0.0
    %167 = vmatpush1.msra.mxu0 %v146
    %168 = vmatprep.subr.mxu0 0.0
    %169 = vmatpush1.msra.mxu0 %v147
    %170 = vmatprep.subr.mxu0 0.0
    %171 = vmatpush1.msra.mxu0 %v148
    %172 = vmatprep.subr.mxu0 0.0
    %173 = vmatpush1.msra.mxu0 %v149
    %174 = vmatprep.subr.mxu0 0.0
    %175 = vmatpush1.msra.mxu0 %v150
    %176 = vmatprep.subr.mxu0 0.0
    %177 = vmatpush1.msra.mxu0 %v151
    %178 = vmatprep.subr.mxu0 0.0
    %179 = vmatpush1.msra.mxu0 %v152
    %180 = vmatprep.subr.mxu0 0.0
    %181 = vmatpush1.msra.mxu0 %v153
    %182 = vmatprep.subr.mxu0 0.0
    %183 = vmatpush1.msra.mxu0 %v154
    %184 = vmatprep.subr.mxu0 0.0
    %185 = vmatpush1.msra.mxu0 %v155
    %186 = vmatprep.subr.mxu0 0.0
    %187 = vmatpush1.msra.mxu0 %v156
    %188 = vmatprep.subr.mxu0 0.0
    %189 = vmatpush1.msra.mxu0 %v157
    %190 = vmatprep.subr.mxu0 0.0
    %191 = vmatpush1.msra.mxu0 0.0
    %192 = vmatprep.subr.mxu0 0.0
    %193 = vmatpush1.msra.mxu0 0.0
    %194 = vmatprep.subr.mxu0 0.0
    %195 = vmatpush1.msra.mxu0 0.0
    %196 = vmatprep.subr.mxu0 0.0
    %197 = vmatpush1.msra.mxu0 0.0
    %198 = vmatprep.subr.mxu0 0.0
    %199 = vmatpush1.msra.mxu0 0.0
    %200 = vmatprep.subr.mxu0 0.0
    %201 = vmatpush1.msra.mxu0 0.0
    %202 = vmatprep.subr.mxu0 0.0
    %203 = vmatpush1.msra.mxu0 0.0
    %204 = vmatprep.subr.mxu0 0.0
    %205 = vmatpush1.msra.mxu0 0.0
    %206 = vmatprep.subr.mxu0 0.0
    %207 = vmatpush1.msra.mxu0 0.0
    %208 = vmatprep.subr.mxu0 0.0
    %209 = vmatpush1.msra.mxu0 0.0
    %210 = vmatprep.subr.mxu0 0.0
    %211 = vmatpush1.msra.mxu0 0.0
    %212 = vmatprep.subr.mxu0 0.0
    %213 = vmatpush1.msra.mxu0 0.0
    %214 = vmatprep.subr.mxu0 0.0
    %215 = vmatpush1.msra.mxu0 0.0
    %216 = vmatprep.subr.mxu0 0.0
    %217 = vmatpush1.msra.mxu0 0.0
    %218 = vmatprep.subr.mxu0 0.0
    %219 = vmatpush1.msra.mxu0 0.0
    %220 = vmatprep.subr.mxu0 0.0
    %221 = vmatpush1.msra.mxu0 0.0
    %222 = vmatprep.mubr.f32.mxu0 0.0
    %223 = vmatmul.mubr.f32.gmra.mrb[0].mxu0 %v141
    %v224 = vpop.f32.mrb[0].mxu0
    %v225 = vadd.f32 0.0, %v224
    %v226 = vpop.f32.mrb[0].mxu0
    %227 = vdwg.mxu0
    %228 = vst [vmem:[#allocation8] sm:$0xff] %v225
    // Predicated region
    $region26: #{tpu_custom_call.1} parent=1 // pred_check
      _
    $region27: #{tpu_custom_call.1} parent=1 // pred_check_branch
      %230 = sbr.rel (0) target = $region29
    $region28: #{tpu_custom_call.1} parent=1 // pred_region
      %s232 = ssub.s32 128, 128
      %233 = vsyncadd [#allocation4], %s232
      %s235 = sshll.u32 [#allocation8], 4
      %s236 = int_to_ptr.vmem [resolvable:$true] %s235
      %238 = dma.vmem_to_hbm [thread:$0]  %s236, 128, %s3, [#allocation4]
    $region29: #{tpu_custom_call.1} parent=1 // pred_fallthru
      _
    // Predicated region
    $region30: #{tpu_custom_call.1} parent=1 // pred_check
      _
    $region31: #{tpu_custom_call.1} parent=1 // pred_check_branch
      %240 = sbr.rel (0) target = $region33
    $region32: #{tpu_custom_call.1} parent=1 // pred_region
      %241 = dma.done [#allocation4], 128
    $region33: #{tpu_custom_call.1} parent=1 // pred_fallthru
      _
    %242 = vsyncpa [#allocation3], 1
    %243 = vsyncpa [#allocation6], 1
    %244 = vsyncpa [#allocation4], 1

</llo_original>
